<compile_context>
chip_gen: v7x
topology: tpu7x:2x2x1
jax: 0.10.0
libtpu: 0.0.40
codegen_flags: <defaults>
</compile_context>

<pallas_src>
import jax
import jax.numpy as jnp
from jax import lax
from jax.experimental import pallas as pl
from jax.experimental.pallas import tpu as pltpu


def value_net_kernel(x_ref, w1_ref, b1_ref, w2_ref, b2_ref, w3_ref, b3_ref, o_ref):
    # x tile: [tile_b, state_dim]; cast to bf16 for the MXU, accumulate in f32.
    x = x_ref[...].astype(jnp.bfloat16)

    # fc1 + ReLU (MXU, f32 accumulation; bias/ReLU in f32 -- valid on v5e too).
    h1 = jnp.dot(x, w1_ref[...], preferred_element_type=jnp.float32) + b1_ref[...]
    h1 = jnp.maximum(h1, 0.0)

    # fc2 + ReLU (MXU).
    h2 = jnp.dot(h1.astype(jnp.bfloat16), w2_ref[...],
                 preferred_element_type=jnp.float32) + b2_ref[...]
    h2 = jnp.maximum(h2, 0.0)

    # fc3 as an M=1 MXU pass producing the result lane-dense: [1, 128] x
    # [tile_b, 128]^T -> [1, tile_b]. The MXU is idle after fc2 and this layout
    # lets the output block be an unmasked, lane-dense store.
    out = lax.dot_general(
        w3_ref[...].astype(jnp.bfloat16), h2.astype(jnp.bfloat16),
        dimension_numbers=(((1,), (1,)), ((), ())),
        preferred_element_type=jnp.float32)          # [1, tile_b]
    o_ref[...] = (out + b3_ref[0, 0]).astype(o_ref.dtype)


def _round_up(n, m):
    return (n + m - 1) // m * m


def value_network(x, params, *, tile_b=2048):
    """ValueNetwork forward. x: [B, state_dim] f32 -> [B, 1] f32.

    `params` should come from prepare_params() (w1/w2 already bf16); raw f32
    params are accepted but incur a per-call cast.
    """
    w1, b1, w2, b2, w3, b3 = params
    B, state_dim = x.shape
    hidden = w1.shape[1]

    # Hoisted ideally (prepare_params); only cast here if handed raw f32 weights.
    w1b = w1 if w1.dtype == jnp.bfloat16 else w1.astype(jnp.bfloat16)
    w2b = w2 if w2.dtype == jnp.bfloat16 else w2.astype(jnp.bfloat16)

    # --- batch tile selection -------------------------------------------------
    tile_b = min(tile_b, B)
    if tile_b < B:
        tile_b = max(8, (tile_b // 8) * 8)           # (8,128) sublane rule
    # v7x megacore: prefer >=2 grid steps so dimension_semantics=("parallel",)
    # can shard the batch across both TensorCores (no-op on v5e/v6e).
    if B >= 16:
        half = _round_up(pl.cdiv(B, 2), 8)
        if half < B:
            tile_b = min(tile_b, half)
    num_tiles = pl.cdiv(B, tile_b)

    # Weights/biases: full blocks with a constant index map -> VMEM-resident
    # across all grid iterations (fetched once).
    def resident(a):
        return pl.BlockSpec(a.shape, lambda i, _nd=a.ndim: (0,) * _nd)

    flops = 2 * B * (state_dim * hidden + hidden * hidden + hidden)
    bytes_accessed = (
        x.size * x.dtype.itemsize            # activations in
        + w1b.size * 2 + w2b.size * 2        # bf16 weights
        + (b1.size + b2.size + w3.size + b3.size) * 4
        + B * 4                              # output
    )

    out = pl.pallas_call(
        value_net_kernel,
        # Lane-dense output slab: one [1, tile_b] row per grid step.
        out_shape=jax.ShapeDtypeStruct((num_tiles, tile_b), jnp.float32),
        grid=(num_tiles,),
        in_specs=[
            pl.BlockSpec((tile_b, state_dim), lambda i: (i, 0)),
            resident(w1b), resident(b1),
            resident(w2b), resident(b2),
            resident(w3),
            # b3 is a single scalar: SMEM, no padded VMEM tile / vector DMA.
            pl.BlockSpec(memory_space=pltpu.MemorySpace.SMEM),
        ],
        out_specs=pl.BlockSpec((1, tile_b), lambda i: (i, 0)),
        compiler_params=pltpu.CompilerParams(
            dimension_semantics=("parallel",),   # shard batch across v7x's 2 TCs
        ),
        cost_estimate=pl.CostEstimate(
            flops=flops, transcendentals=0, bytes_accessed=bytes_accessed),
    )(x, w1b, b1, w2b, b2, w3, b3)

    # (num_tiles, tile_b) -> (B, 1); drops padded tail rows of a partial tile.
    return out.reshape(-1)[:B].reshape(B, 1)


def init_params(key, state_dim, hidden=128):
    """Deterministic init mirroring nn.Linear's U(-1/sqrt(fan_in), 1/sqrt(fan_in)).

    w1/w2 are stored [in, out] (transposed vs. PyTorch); w3 is the lane-dense
    [1, hidden] row (same layout as PyTorch fc3.weight); biases are [1, out].
    """
    k = jax.random.split(key, 6)

    def linear_t(kw, kb, fan_in, fan_out):
        bound = 1.0 / jnp.sqrt(fan_in)
        w = jax.random.uniform(kw, (fan_in, fan_out), jnp.float32, -bound, bound)
        b = jax.random.uniform(kb, (1, fan_out), jnp.float32, -bound, bound)
        return w, b

    w1, b1 = linear_t(k[0], k[1], state_dim, hidden)
    w2, b2 = linear_t(k[2], k[3], hidden, hidden)
    bound3 = 1.0 / jnp.sqrt(hidden)
    w3 = jax.random.uniform(k[4], (1, hidden), jnp.float32, -bound3, bound3)
    b3 = jax.random.uniform(k[5], (1, 1), jnp.float32, -bound3, bound3)
    return (w1, b1, w2, b2, w3, b3)


def prepare_params(params):
    """One-time cast of the MXU-facing weights to bf16 (hoists the per-call cast
    kernels / HBM round-trip out of the PPO step). fc3 row and biases stay f32."""
    w1, b1, w2, b2, w3, b3 = params
    return (w1.astype(jnp.bfloat16), b1, w2.astype(jnp.bfloat16), b2, w3, b3)


def value_network_ref(x, params_f32):
    """Pure-JAX f32 reference (PyTorch-equivalent math)."""
    w1, b1, w2, b2, w3, b3 = params_f32
    h1 = jnp.maximum(x @ w1 + b1, 0.0)
    h2 = jnp.maximum(h1 @ w2 + b2, 0.0)
    return h2 @ w3.T + b3


if __name__ == "__main__":
    B = 8           # batch (small demo)
    STATE_DIM = 32  # state dimension

    key = jax.random.PRNGKey(0)
    k_params, k_x, k_x2 = jax.random.split(key, 3)
    params_f32 = init_params(k_params, STATE_DIM)
    params = prepare_params(params_f32)   # bf16 weights cached once

    # Small-batch demo (single grid step, full-batch tile).
    x = jax.random.normal(k_x, (B, STATE_DIM), dtype=jnp.float32)
    out = jax.block_until_ready(value_network(x, params))
    ref = value_network_ref(x, params_f32)
    assert out.shape == (B, 1), out.shape
    # bf16 matmul inputs => loosened tolerance vs. the f32 reference.
    assert jnp.allclose(out, ref, atol=3e-2, rtol=3e-2), "mismatch vs reference (B=8)"

    # Larger batch exercises the batch grid (>=2 parallel tiles, resident weights,
    # lane-dense output slab).
    B2 = 1024
    x2 = jax.random.normal(k_x2, (B2, STATE_DIM), dtype=jnp.float32)
    out2 = jax.block_until_ready(value_network(x2, params))
    ref2 = value_network_ref(x2, params_f32)
    assert out2.shape == (B2, 1), out2.shape
    assert jnp.allclose(out2, ref2, atol=3e-2, rtol=3e-2), "mismatch vs reference (B=1024)"

    print("KERNEL_OK")
</pallas_src>

<mosaic_0001>
module attributes {stable_mosaic.version = 11 : i64} {
  func.func @value_net_kernel(%arg0: i32, %arg1: memref<8x32xf32, #tpu.memory_space<vmem>>, %arg2: memref<32x128xbf16, #tpu.memory_space<vmem>>, %arg3: memref<1x128xf32, #tpu.memory_space<vmem>>, %arg4: memref<128x128xbf16, #tpu.memory_space<vmem>>, %arg5: memref<1x128xf32, #tpu.memory_space<vmem>>, %arg6: memref<1x128xf32, #tpu.memory_space<vmem>>, %arg7: memref<1x1xf32, #tpu.memory_space<smem>>, %arg8: memref<1x8xf32, #tpu.memory_space<vmem>>) attributes {dimension_semantics = [#tpu.dimension_semantics<parallel>], iteration_bounds = array<i64: 1>, scalar_prefetch = 0 : i64, scratch_operands = 0 : i64, tpu.core_type = #tpu.core_type<tc>, window_params = [{transform_indices = @transform_0, window_bounds = array<i64: 8, 32>}, {pipeline_mode = #tpu.pipeline_mode<synchronous>, transform_indices = @transform_1, window_bounds = array<i64: 32, 128>}, {pipeline_mode = #tpu.pipeline_mode<synchronous>, transform_indices = @transform_2, window_bounds = array<i64: 1, 128>}, {pipeline_mode = #tpu.pipeline_mode<synchronous>, transform_indices = @transform_3, window_bounds = array<i64: 128, 128>}, {pipeline_mode = #tpu.pipeline_mode<synchronous>, transform_indices = @transform_4, window_bounds = array<i64: 1, 128>}, {pipeline_mode = #tpu.pipeline_mode<synchronous>, transform_indices = @transform_5, window_bounds = array<i64: 1, 128>}, {transform_indices = @transform_6, window_bounds = array<i64: 1, 1>}, {transform_indices = @transform_7, window_bounds = array<i64: 1, 8>}]} {
    %c0 = arith.constant 0 : index
    %c0_0 = arith.constant 0 : index
    %0 = vector.load %arg1[%c0, %c0_0] : memref<8x32xf32, #tpu.memory_space<vmem>>, vector<8x32xf32>
    %1 = arith.truncf %0 : vector<8x32xf32> to vector<8x32xbf16>
    %c0_1 = arith.constant 0 : index
    %c0_2 = arith.constant 0 : index
    %2 = vector.load %arg2[%c0_1, %c0_2] : memref<32x128xbf16, #tpu.memory_space<vmem>>, vector<32x128xbf16>
    %cst = arith.constant dense<0.000000e+00> : vector<8x128xf32>
    %3 = tpu.matmul %1, %2, %cst {dimension_numbers = #tpu.dot_dimension_numbers<[1], [0], [0], [1], [0, 0, 1, 1], [], []>} : vector<8x32xbf16>, vector<32x128xbf16>, vector<8x128xf32> -> vector<8x128xf32>
    %c0_3 = arith.constant 0 : index
    %c0_4 = arith.constant 0 : index
    %4 = vector.load %arg3[%c0_3, %c0_4] : memref<1x128xf32, #tpu.memory_space<vmem>>, vector<1x128xf32>
    %5 = vector.broadcast %4 : vector<1x128xf32> to vector<8x128xf32>
    %6 = arith.addf %3, %5 : vector<8x128xf32>
    %cst_5 = arith.constant 0.000000e+00 : f32
    %7 = vector.broadcast %cst_5 : f32 to vector<8x128xf32>
    %8 = arith.maximumf %6, %7 : vector<8x128xf32>
    %9 = arith.truncf %8 : vector<8x128xf32> to vector<8x128xbf16>
    %c0_6 = arith.constant 0 : index
    %c0_7 = arith.constant 0 : index
    %10 = vector.load %arg4[%c0_6, %c0_7] : memref<128x128xbf16, #tpu.memory_space<vmem>>, vector<128x128xbf16>
    %cst_8 = arith.constant dense<0.000000e+00> : vector<8x128xf32>
    %11 = tpu.matmul %9, %10, %cst_8 {dimension_numbers = #tpu.dot_dimension_numbers<[1], [0], [0], [1], [0, 0, 1, 1], [], []>} : vector<8x128xbf16>, vector<128x128xbf16>, vector<8x128xf32> -> vector<8x128xf32>
    %c0_9 = arith.constant 0 : index
    %c0_10 = arith.constant 0 : index
    %12 = vector.load %arg5[%c0_9, %c0_10] : memref<1x128xf32, #tpu.memory_space<vmem>>, vector<1x128xf32>
    %13 = vector.broadcast %12 : vector<1x128xf32> to vector<8x128xf32>
    %14 = arith.addf %11, %13 : vector<8x128xf32>
    %cst_11 = arith.constant 0.000000e+00 : f32
    %15 = vector.broadcast %cst_11 : f32 to vector<8x128xf32>
    %16 = arith.maximumf %14, %15 : vector<8x128xf32>
    %c0_12 = arith.constant 0 : index
    %c0_13 = arith.constant 0 : index
    %17 = vector.load %arg6[%c0_12, %c0_13] : memref<1x128xf32, #tpu.memory_space<vmem>>, vector<1x128xf32>
    %18 = arith.truncf %17 : vector<1x128xf32> to vector<1x128xbf16>
    %19 = arith.truncf %16 : vector<8x128xf32> to vector<8x128xbf16>
    %cst_14 = arith.constant dense<0.000000e+00> : vector<1x8xf32>
    %20 = tpu.matmul %18, %19, %cst_14 {dimension_numbers = #tpu.dot_dimension_numbers<[1], [1], [0], [0], [0, 0, 1, 0], [], []>} : vector<1x128xbf16>, vector<8x128xbf16>, vector<1x8xf32> -> vector<1x8xf32>
    %c0_15 = arith.constant 0 : index
    %c0_16 = arith.constant 0 : index
    %21 = memref.load %arg7[%c0_15, %c0_16] : memref<1x1xf32, #tpu.memory_space<smem>>
    %22 = vector.broadcast %21 : f32 to vector<1x8xf32>
    %23 = arith.addf %20, %22 : vector<1x8xf32>
    %c0_17 = arith.constant 0 : index
    %c0_18 = arith.constant 0 : index
    %24 = vector.load %arg8[%c0_17, %c0_18] : memref<1x8xf32, #tpu.memory_space<vmem>>, vector<1x8xf32>
    tpu.vector_store %arg8[%c0_17, %c0_18], %23 {strides = array<i32>} : memref<1x8xf32, #tpu.memory_space<vmem>>, vector<1x8xf32>,
    return
  }
  func.func @transform_0(%arg0: i32) -> (i32, i32) {
    %c0_i32 = arith.constant 0 : i32
    %c0_i32_0 = arith.constant 0 : i32
    return %arg0, %c0_i32 : i32, i32
  }
  func.func @transform_1(%arg0: i32) -> (i32, i32) {
    %c0_i32 = arith.constant 0 : i32
    %c0_i32_0 = arith.constant 0 : i32
    %c0_i32_1 = arith.constant 0 : i32
    return %c0_i32, %c0_i32_0 : i32, i32
  }
  func.func @transform_2(%arg0: i32) -> (i32, i32) {
    %c0_i32 = arith.constant 0 : i32
    %c0_i32_0 = arith.constant 0 : i32
    %c0_i32_1 = arith.constant 0 : i32
    return %c0_i32, %c0_i32_0 : i32, i32
  }
  func.func @transform_3(%arg0: i32) -> (i32, i32) {
    %c0_i32 = arith.constant 0 : i32
    %c0_i32_0 = arith.constant 0 : i32
    %c0_i32_1 = arith.constant 0 : i32
    return %c0_i32, %c0_i32_0 : i32, i32
  }
  func.func @transform_4(%arg0: i32) -> (i32, i32) {
    %c0_i32 = arith.constant 0 : i32
    %c0_i32_0 = arith.constant 0 : i32
    %c0_i32_1 = arith.constant 0 : i32
    return %c0_i32, %c0_i32_0 : i32, i32
  }
  func.func @transform_5(%arg0: i32) -> (i32, i32) {
    %c0_i32 = arith.constant 0 : i32
    %c0_i32_0 = arith.constant 0 : i32
    %c0_i32_1 = arith.constant 0 : i32
    return %c0_i32, %c0_i32_0 : i32, i32
  }
  func.func @transform_6(%arg0: i32) -> (i32, i32) {
    %c0_i32 = arith.constant 0 : i32
    %c0_i32_0 = arith.constant 0 : i32
    %c0_i32_1 = arith.constant 0 : i32
    return %c0_i32, %c0_i32_0 : i32, i32
  }
  func.func @transform_7(%arg0: i32) -> (i32, i32) {
    %c0_i32 = arith.constant 0 : i32
    %c0_i32_0 = arith.constant 0 : i32
    return %arg0, %c0_i32 : i32, i32
  }
}

</mosaic_0001>

<llo_original>
// kernel: tpu_custom_call.1
$region0: #{tpu_custom_call.1}
  #allocation0 [shape = 'u32[]', space=smem, size = 0x4, offset = 0x4, fixed_abs, tag = 'smem constant byte address 0x4 - core index']
  #allocation1 [shape = 'u32[144,128]{1,0:T(1,128)}', space=vmem, size = 0x12000, scoped, tag = 'internal scratch']
  #allocation2 [shape = 'f32[1,1]{1,0:T(1,128)S(6)}', space=smem, size = 0x200, scoped, tag = 'scoped memory for tpu_custom_call.1']
  %s0 = inlined_call_operand.hbm [shape: f32[8,32], index: 0, kind: input, shape index: {}]
  %s1 = inlined_call_operand.hbm [shape: bf16[32,128], index: 1, kind: input, shape index: {}]
  %s2 = inlined_call_operand.vmem [shape: f32[1,128], index: 2, kind: input, shape index: {}]
  %s3 = inlined_call_operand.hbm [shape: bf16[128,128], index: 3, kind: input, shape index: {}]
  %s4 = inlined_call_operand.vmem [shape: f32[1,128], index: 4, kind: input, shape index: {}]
  %s5 = inlined_call_operand.vmem [shape: f32[1,128], index: 5, kind: input, shape index: {}]
  %s6 = inlined_call_operand.<no memory space> [shape: f32[1,1], index: 6, kind: input, shape index: {}]
  %s7 = inlined_call_operand.hbm [shape: f32[1,8], index: 7, kind: output, shape index: {}]
  %s8 = sld [smem:[#allocation0]]
  $region50: #{tpu_custom_call.1} parent=0
    _
  %s10 = ssub.s32 1, %s8
  %s11 = scalar_select 0, %s10, %s8
  %12 = sst [smem:[#allocation2]] %s6
  $region1: #{tpu_custom_call.1} parent=0
    #allocation3 [shape = 'u8[4096]{0}', space=vmem, size = 0x1000, scoped, tag = 'input window, operand 0, single buffered']
    #allocation4 [shape = 's32[1]{0}', space=sflag, size = 0x4, scoped, tag = 'scoped memory for tpu_custom_call.1']
    #allocation5 [shape = 's32[1]{0}', space=sflag, size = 0x4, scoped, tag = 'scoped memory for tpu_custom_call.1']
    #allocation6 [shape = 'u8[8192]{0}', space=vmem, size = 0x2000, scoped, tag = 'input window, operand 1, single buffered']
    #allocation7 [shape = 's32[1]{0}', space=sflag, size = 0x4, scoped, tag = 'scoped memory for tpu_custom_call.1']
    #allocation8 [shape = 'u8[32768]{0}', space=vmem, size = 0x8000, scoped, tag = 'input window, operand 3, single buffered']
    #allocation9 [shape = 'u8[512]{0}', space=vmem, size = 0x400, scoped, tag = 'output window, operand 0, single buffered']
    %13 = vsyncpa [#allocation4], 0
    %14 = vsyncpa [#allocation7], 0
    %15 = vsyncpa [#allocation5], 0
    // Predicated region
    $region2: #{tpu_custom_call.1} parent=1 // pred_check
      _
    $region3: #{tpu_custom_call.1} parent=1 // pred_check_branch
      %17 = sbr.rel (0) target = $region5
    $region4: #{tpu_custom_call.1} parent=1 // pred_region
      %s19 = ssub.s32 128, 128
      %20 = vsyncadd [#allocation4], %s19
      %s22 = sshll.u32 [#allocation3], 4
      %s23 = int_to_ptr.vmem [resolvable:$true] %s22
      %25 = dma.hbm_to_vmem [thread:$0]  %s0, 128, %s23, [#allocation4]
    $region5: #{tpu_custom_call.1} parent=1 // pred_fallthru
      _
    // Predicated region
    $region6: #{tpu_custom_call.1} parent=1 // pred_check
      _
    $region7: #{tpu_custom_call.1} parent=1 // pred_check_branch
      %27 = sbr.rel (0) target = $region9
    $region8: #{tpu_custom_call.1} parent=1 // pred_region
      %s29 = ssub.s32 256, 256
      %30 = vsyncadd [#allocation7], %s29
      %s31 = sshll.u32 [#allocation6], 4
      %s32 = int_to_ptr.vmem [resolvable:$true] %s31
      %37 = dma.hbm_to_vmem [thread:$0]  %s1, 256, %s32, [#allocation7], 64, 64, 4
    $region9: #{tpu_custom_call.1} parent=1 // pred_fallthru
      _
    // Predicated region
    $region10: #{tpu_custom_call.1} parent=1 // pred_check
      _
    $region11: #{tpu_custom_call.1} parent=1 // pred_check_branch
      %39 = sbr.rel (0) target = $region13
    $region12: #{tpu_custom_call.1} parent=1 // pred_region
      _
    $region13: #{tpu_custom_call.1} parent=1 // pred_fallthru
      _
    // Predicated region
    $region14: #{tpu_custom_call.1} parent=1 // pred_check
      _
    $region15: #{tpu_custom_call.1} parent=1 // pred_check_branch
      %41 = sbr.rel (0) target = $region17
    $region16: #{tpu_custom_call.1} parent=1 // pred_region
      %s43 = ssub.s32 1024, 1024
      %44 = vsyncadd [#allocation7], %s43
      %s45 = sshll.u32 [#allocation8], 4
      %s46 = int_to_ptr.vmem [resolvable:$true] %s45
      %51 = dma.hbm_to_vmem [thread:$0]  %s3, 1024, %s46, [#allocation7], 64, 64, 4
    $region17: #{tpu_custom_call.1} parent=1 // pred_fallthru
      _
    // Predicated region
    $region18: #{tpu_custom_call.1} parent=1 // pred_check
      _
    $region19: #{tpu_custom_call.1} parent=1 // pred_check_branch
      %53 = sbr.rel (0) target = $region21
    $region20: #{tpu_custom_call.1} parent=1 // pred_region
      _
    $region21: #{tpu_custom_call.1} parent=1 // pred_fallthru
      _
    // Predicated region
    $region22: #{tpu_custom_call.1} parent=1 // pred_check
      _
    $region23: #{tpu_custom_call.1} parent=1 // pred_check_branch
      %55 = sbr.rel (0) target = $region25
    $region24: #{tpu_custom_call.1} parent=1 // pred_region
      _
    $region25: #{tpu_custom_call.1} parent=1 // pred_fallthru
      _
    // Predicated region
    $region26: #{tpu_custom_call.1} parent=1 // pred_check
      _
    $region27: #{tpu_custom_call.1} parent=1 // pred_check_branch
      %57 = sbr.rel (0) target = $region29
    $region28: #{tpu_custom_call.1} parent=1 // pred_region
      _
    $region29: #{tpu_custom_call.1} parent=1 // pred_fallthru
      _
    // Predicated region
    $region30: #{tpu_custom_call.1} parent=1 // pred_check
      _
    $region31: #{tpu_custom_call.1} parent=1 // pred_check_branch
      %59 = sbr.rel (0) target = $region33
    $region32: #{tpu_custom_call.1} parent=1 // pred_region
      %60 = dma.done [#allocation4], 128
    $region33: #{tpu_custom_call.1} parent=1 // pred_fallthru
      _
    // Predicated region
    $region34: #{tpu_custom_call.1} parent=1 // pred_check
      _
    $region35: #{tpu_custom_call.1} parent=1 // pred_check_branch
      %62 = sbr.rel (0) target = $region37
    $region36: #{tpu_custom_call.1} parent=1 // pred_region
      %63 = dma.done [#allocation7], 256
    $region37: #{tpu_custom_call.1} parent=1 // pred_fallthru
      _
    // Predicated region
    $region38: #{tpu_custom_call.1} parent=1 // pred_check
      _
    $region39: #{tpu_custom_call.1} parent=1 // pred_check_branch
      %65 = sbr.rel (0) target = $region41
    $region40: #{tpu_custom_call.1} parent=1 // pred_region
      %66 = dma.done [#allocation7], 1024
    $region41: #{tpu_custom_call.1} parent=1 // pred_fallthru
      _
    %v68 = vld [vmem:[#allocation3] sm:$0xff]
    %v69 = vpack.c.bf16 %v68, %v68
    %v70 = vld [vmem:[#allocation6] sm:$0xf]
    %v71 = vld [vmem:[#allocation6 + $0x4] sm:$0xf]
    %v72 = vld [vmem:[#allocation6 + $0x8] sm:$0xf]
    %v73 = vld [vmem:[#allocation6 + $0xc] sm:$0xf]
    %v74 = vld [vmem:[%s2] sm:$0x1]
    %v76 = vlaneseq
    %v77 = vshrl.u32 %v76, 7
    %v78 = vsub.s32 0, %v77
    %v79 = vrot.slane %v74, %v78
    %v85 = vunpack.c.l.b16 %v70
    %v86 = vunpack.c.l.b16 %v71
    %v87 = vunpack.c.l.b16 %v72
    %v88 = vunpack.c.l.b16 %v73
    %v89 = vpack.c.b16 %v86, %v85
    %v90 = vpack.c.b16 %v88, %v87
    %vm93 = vcmask 261120
    %v95 = vsel %vm93, %v69, 0
    %97 = vmatprep.subr.bf16.mxu0 0
    %98 = vmatpush1.bf16.msra.mxu0 %v89
    %99 = vmatprep.subr.bf16.mxu0 0
    %100 = vmatpush1.bf16.msra.mxu0 %v90
    %101 = vmatprep.subr.bf16.mxu0 0
    %102 = vmatpush1.bf16.msra.mxu0 0
    %103 = vmatprep.subr.bf16.mxu0 0
    %104 = vmatpush1.bf16.msra.mxu0 0
    %105 = vmatprep.subr.bf16.mxu0 0
    %106 = vmatpush1.bf16.msra.mxu0 0
    %107 = vmatprep.subr.bf16.mxu0 0
    %108 = vmatpush1.bf16.msra.mxu0 0
    %109 = vmatprep.subr.bf16.mxu0 0
    %110 = vmatpush1.bf16.msra.mxu0 0
    %111 = vmatprep.subr.bf16.mxu0 0
    %112 = vmatpush1.bf16.msra.mxu0 0
    %113 = vmatprep.subr.bf16.mxu0 0
    %114 = vmatpush1.bf16.msra.mxu0 0
    %115 = vmatprep.subr.bf16.mxu0 0
    %116 = vmatpush1.bf16.msra.mxu0 0
    %117 = vmatprep.subr.bf16.mxu0 0
    %118 = vmatpush1.bf16.msra.mxu0 0
    %119 = vmatprep.subr.bf16.mxu0 0
    %120 = vmatpush1.bf16.msra.mxu0 0
    %121 = vmatprep.subr.bf16.mxu0 0
    %122 = vmatpush1.bf16.msra.mxu0 0
    %123 = vmatprep.subr.bf16.mxu0 0
    %124 = vmatpush1.bf16.msra.mxu0 0
    %125 = vmatprep.subr.bf16.mxu0 0
    %126 = vmatpush1.bf16.msra.mxu0 0
    %127 = vmatprep.subr.bf16.mxu0 0
    %128 = vmatpush1.bf16.msra.mxu0 0
    %129 = vmatprep.mubr.bf16.mxu0 0
    %130 = vmatmul.mubr.bf16.gmra.mrb[0].mxu0 %v95
    %v131 = vpop.f32.mrb[0].mxu0
    %v132 = vadd.f32 %v79, %v131
    %v133 = vpop.f32.mrb[0].mxu0
    %v134 = vpop.f32.mrb[0].mxu0
    %v135 = vpop.f32.mrb[0].mxu0
    %136 = vdwg.mxu0
    %v137 = vmax.f32 %v132, 0.0
    %v138 = vpack.c.bf16 %v137, %v137
    %v139 = vld [vmem:[#allocation8] sm:$0xf]
    %v140 = vld [vmem:[#allocation8 + $0x4] sm:$0xf]
    %v141 = vld [vmem:[#allocation8 + $0x8] sm:$0xf]
    %v142 = vld [vmem:[#allocation8 + $0xc] sm:$0xf]
    %v143 = vld [vmem:[#allocation8 + $0x10] sm:$0xf]
    %v144 = vld [vmem:[#allocation8 + $0x14] sm:$0xf]
    %v145 = vld [vmem:[#allocation8 + $0x18] sm:$0xf]
    %v146 = vld [vmem:[#allocation8 + $0x1c] sm:$0xf]
    %v147 = vld [vmem:[#allocation8 + $0x20] sm:$0xf]
    %v148 = vld [vmem:[#allocation8 + $0x24] sm:$0xf]
    %v149 = vld [vmem:[#allocation8 + $0x28] sm:$0xf]
    %v150 = vld [vmem:[#allocation8 + $0x2c] sm:$0xf]
    %v151 = vld [vmem:[#allocation8 + $0x30] sm:$0xf]
    %v152 = vld [vmem:[#allocation8 + $0x34] sm:$0xf]
    %v153 = vld [vmem:[#allocation8 + $0x38] sm:$0xf]
    %v154 = vld [vmem:[#allocation8 + $0x3c] sm:$0xf]
    %v155 = vld [vmem:[%s4] sm:$0x1]
    %v157 = vlaneseq
    %v158 = vshrl.u32 %v157, 7
    %v159 = vsub.s32 0, %v158
    %v160 = vrot.slane %v155, %v159
    %v178 = vunpack.c.l.b16 %v139
    %v179 = vunpack.c.l.b16 %v140
    %v180 = vunpack.c.l.b16 %v141
    %v181 = vunpack.c.l.b16 %v142
    %v182 = vunpack.c.l.b16 %v143
    %v183 = vunpack.c.l.b16 %v144
    %v184 = vunpack.c.l.b16 %v145
    %v185 = vunpack.c.l.b16 %v146
    %v186 = vunpack.c.l.b16 %v147
    %v187 = vunpack.c.l.b16 %v148
    %v188 = vunpack.c.l.b16 %v149
    %v189 = vunpack.c.l.b16 %v150
    %v190 = vunpack.c.l.b16 %v151
    %v191 = vunpack.c.l.b16 %v152
    %v192 = vunpack.c.l.b16 %v153
    %v193 = vunpack.c.l.b16 %v154
    %v194 = vpack.c.b16 %v179, %v178
    %v195 = vpack.c.b16 %v181, %v180
    %v196 = vpack.c.b16 %v183, %v182
    %v197 = vpack.c.b16 %v185, %v184
    %v198 = vpack.c.b16 %v187, %v186
    %v199 = vpack.c.b16 %v189, %v188
    %v200 = vpack.c.b16 %v191, %v190
    %v201 = vpack.c.b16 %v193, %v192
    %210 = vmatprep.subr.bf16.mxu0 0
    %211 = vmatpush1.bf16.msra.mxu0 %v194
    %212 = vmatprep.subr.bf16.mxu0 0
    %213 = vmatpush1.bf16.msra.mxu0 %v195
    %214 = vmatprep.subr.bf16.mxu0 0
    %215 = vmatpush1.bf16.msra.mxu0 %v196
    %216 = vmatprep.subr.bf16.mxu0 0
    %217 = vmatpush1.bf16.msra.mxu0 %v197
    %218 = vmatprep.subr.bf16.mxu0 0
    %219 = vmatpush1.bf16.msra.mxu0 %v198
    %220 = vmatprep.subr.bf16.mxu0 0
    %221 = vmatpush1.bf16.msra.mxu0 %v199
    %222 = vmatprep.subr.bf16.mxu0 0
    %223 = vmatpush1.bf16.msra.mxu0 %v200
    %224 = vmatprep.subr.bf16.mxu0 0
    %225 = vmatpush1.bf16.msra.mxu0 %v201
    %226 = vmatprep.subr.bf16.mxu0 0
    %227 = vmatpush1.bf16.msra.mxu0 0
    %228 = vmatprep.subr.bf16.mxu0 0
    %229 = vmatpush1.bf16.msra.mxu0 0
    %230 = vmatprep.subr.bf16.mxu0 0
    %231 = vmatpush1.bf16.msra.mxu0 0
    %232 = vmatprep.subr.bf16.mxu0 0
    %233 = vmatpush1.bf16.msra.mxu0 0
    %234 = vmatprep.subr.bf16.mxu0 0
    %235 = vmatpush1.bf16.msra.mxu0 0
    %236 = vmatprep.subr.bf16.mxu0 0
    %237 = vmatpush1.bf16.msra.mxu0 0
    %238 = vmatprep.subr.bf16.mxu0 0
    %239 = vmatpush1.bf16.msra.mxu0 0
    %240 = vmatprep.subr.bf16.mxu0 0
    %241 = vmatpush1.bf16.msra.mxu0 0
    %242 = vmatprep.mubr.bf16.mxu0 0
    %243 = vmatmul.mubr.bf16.gmra.mrb[0].mxu0 %v138
    %v244 = vpop.f32.mrb[0].mxu0
    %v245 = vadd.f32 %v160, %v244
    %v246 = vpop.f32.mrb[0].mxu0
    %v247 = vpop.f32.mrb[0].mxu0
    %v248 = vpop.f32.mrb[0].mxu0
    %249 = vdwg.mxu0
    %v250 = vmax.f32 %v245, 0.0
    %v251 = vld [vmem:[%s5] sm:$0x1]
    %v252 = vpack.c.bf16 %v251, %v251
    %v253 = vpack.c.bf16 %v250, %v250
    %s254 = sld [smem:[#allocation2]]
    %v255 = vstv %s254
    %256 = vmatprep.subr.bf16.mxu0 0
    %257 = vmatpush1.bf16.xpose.msra.mxu0 %v253
    %258 = vmatprep.subr.bf16.mxu0 0
    %259 = vmatpush1.bf16.xpose.msra.mxu0 0
    %260 = vmatprep.subr.bf16.mxu0 0
    %261 = vmatpush1.bf16.xpose.msra.mxu0 0
    %262 = vmatprep.subr.bf16.mxu0 0
    %263 = vmatpush1.bf16.xpose.msra.mxu0 0
    %264 = vmatprep.subr.bf16.mxu0 0
    %265 = vmatpush1.bf16.xpose.msra.mxu0 0
    %266 = vmatprep.subr.bf16.mxu0 0
    %267 = vmatpush1.bf16.xpose.msra.mxu0 0
    %268 = vmatprep.subr.bf16.mxu0 0
    %269 = vmatpush1.bf16.xpose.msra.mxu0 0
    %270 = vmatprep.subr.bf16.mxu0 0
    %271 = vmatpush1.bf16.xpose.msra.mxu0 0
    %272 = vmatprep.subr.bf16.mxu0 0
    %273 = vmatpush1.bf16.xpose.msra.mxu0 0
    %274 = vmatprep.subr.bf16.mxu0 0
    %275 = vmatpush1.bf16.xpose.msra.mxu0 0
    %276 = vmatprep.subr.bf16.mxu0 0
    %277 = vmatpush1.bf16.xpose.msra.mxu0 0
    %278 = vmatprep.subr.bf16.mxu0 0
    %279 = vmatpush1.bf16.xpose.msra.mxu0 0
    %280 = vmatprep.subr.bf16.mxu0 0
    %281 = vmatpush1.bf16.xpose.msra.mxu0 0
    %282 = vmatprep.subr.bf16.mxu0 0
    %283 = vmatpush1.bf16.xpose.msra.mxu0 0
    %284 = vmatprep.subr.bf16.mxu0 0
    %285 = vmatpush1.bf16.xpose.msra.mxu0 0
    %286 = vmatprep.subr.bf16.mxu0 0
    %287 = vmatpush1.bf16.xpose.msra.mxu0 0
    %288 = vmatprep.mubr.bf16.mxu0 0
    %289 = vmatmul.mubr.bf16.gmra.mrb[0].mxu0 %v252
    %v290 = vpop.f32.mrb[0].mxu0
    %v291 = vadd.f32 %v255, %v290
    %v292 = vpop.f32.mrb[0].mxu0
    %v293 = vpop.f32.mrb[0].mxu0
    %v294 = vpop.f32.mrb[0].mxu0
    %295 = vdwg.mxu0
    %vm296 = vcmask 57344
    %297 = vst.msk [vmem:[#allocation9] sm:$0x1] %vm296, %v291
    // Predicated region
    $region42: #{tpu_custom_call.1} parent=1 // pred_check
      _
    $region43: #{tpu_custom_call.1} parent=1 // pred_check_branch
      %299 = sbr.rel (0) target = $region45
    $region44: #{tpu_custom_call.1} parent=1 // pred_region
      %s301 = ssub.s32 16, 16
      %302 = vsyncadd [#allocation5], %s301
      %s304 = sshll.u32 [#allocation9], 4
      %s305 = int_to_ptr.vmem [resolvable:$true] %s304
      %307 = dma.vmem_to_hbm [thread:$0]  %s305, 16, %s7, [#allocation5]
    $region45: #{tpu_custom_call.1} parent=1 // pred_fallthru
      _
    // Predicated region
    $region46: #{tpu_custom_call.1} parent=1 // pred_check
      _
    $region47: #{tpu_custom_call.1} parent=1 // pred_check_branch
      %309 = sbr.rel (0) target = $region49
    $region48: #{tpu_custom_call.1} parent=1 // pred_region
      %310 = dma.done [#allocation5], 16
    $region49: #{tpu_custom_call.1} parent=1 // pred_fallthru
      _
    %311 = vsyncpa [#allocation4], 1
    %312 = vsyncpa [#allocation7], 1
    %313 = vsyncpa [#allocation5], 1

</llo_original>
